<compile_context>
chip_gen: v7x
topology: tpu7x:2x2x1
jax: 0.10.0
libtpu: 0.0.40
codegen_flags: <defaults>
</compile_context>

<pallas_src>
import jax
import jax.numpy as jnp
from jax.experimental import pallas as pl
from jax.experimental.pallas import tpu as pltpu


def _round_up(n, m):
    return ((n + m - 1) // m) * m


def rejnet_kernel(w1_ref, b1_ref, w2_ref, b2_ref, w3_ref, b3_ref, x_ref, o_ref):
    # x tile: (TM, d) bf16, streamed per grid step. Weights are VMEM-resident.
    x = x_ref[...]

    # Layer 1: MXU matmul (bf16 operands, f32 accumulate) + f32 bias/tanh.
    h1 = jnp.dot(x, w1_ref[...], preferred_element_type=jnp.float32) + b1_ref[...]
    h1 = jnp.tanh(h1)

    # Layer 2: cast activations to bf16 for the MXU, keep math in f32.
    h2 = jnp.dot(h1.astype(jnp.bfloat16), w2_ref[...],
                 preferred_element_type=jnp.float32) + b2_ref[...]
    h2 = jnp.tanh(h2)

    # Layer 3 (32 -> 1): an N=1 matmul would use a sliver of the MXU, so do it
    # as a VPU multiply + cross-lane reduce (rides the otherwise-idle XLU).
    out = jnp.sum(h2 * w3_ref[...], axis=-1, keepdims=True) + b3_ref[...]
    o_ref[...] = out.astype(o_ref.dtype)


def rejnet_forward(x, params, *, tm=8192):
    """x: (B, d) float32; params: dict of pre-transposed f32 weights/biases.

    Returns (B, 1) float32. Streams the batch through the kernel in tiles of
    up to `tm` rows (default 8192 amortizes the ~0.35us per-grid-step cost
    while staying well inside scoped VMEM on v5e/v6e/v7x).
    """
    B, d = x.shape

    # Cast MXU operands to bf16; biases and the tiny final weight row stay f32.
    w1 = params["w1"].astype(jnp.bfloat16)          # (d, 64)
    w2 = params["w2"].astype(jnp.bfloat16)          # (64, 32)
    w3_row = params["w3"].reshape(1, -1).astype(jnp.float32)  # (1, 32)
    b1 = params["b1"].astype(jnp.float32)           # (1, 64)
    b2 = params["b2"].astype(jnp.float32)           # (1, 32)
    b3 = params["b3"].astype(jnp.float32)           # (1, 1)

    # Effective batch tile: multiple of 8 sublanes, no bigger than needed.
    tm_eff = _round_up(min(tm, _round_up(B, 8)), 8)
    b_pad = _round_up(B, tm_eff)

    x_bf16 = x.astype(jnp.bfloat16)
    if b_pad != B:
        x_bf16 = jnp.pad(x_bf16, ((0, b_pad - B), (0, 0)))

    grid = (b_pad // tm_eff,)

    # Weights/biases first (constant index_maps -> fetched once, VMEM-resident),
    # the streamed x tile last.
    resident = lambda shape: pl.BlockSpec(shape, lambda i: (0, 0))
    in_specs = [
        resident(w1.shape), resident(b1.shape),
        resident(w2.shape), resident(b2.shape),
        resident(w3_row.shape), resident(b3.shape),
        pl.BlockSpec((tm_eff, d), lambda i: (i, 0)),
    ]
    out_spec = pl.BlockSpec((tm_eff, 1), lambda i: (i, 0))

    out = pl.pallas_call(
        rejnet_kernel,
        out_shape=jax.ShapeDtypeStruct((b_pad, 1), jnp.float32),
        grid=grid,
        in_specs=in_specs,
        out_specs=out_spec,
        compiler_params=pltpu.CompilerParams(
            dimension_semantics=("parallel",),
            vmem_limit_bytes=32 * 1024 * 1024,
        ),
    )(w1, b1, w2, b2, w3_row, b3, x_bf16)

    return out[:B]


def init_params(key, d):
    """Deterministic init mimicking PyTorch nn.Linear default
    (U[-1/sqrt(fan_in), +1/sqrt(fan_in)]). Weights stored transposed:
    (in_features, out_features); biases as (1, out_features) rows."""
    keys = jax.random.split(key, 6)
    dims = [(d, 64), (64, 32), (32, 1)]
    params = {}
    for i, (fan_in, fan_out) in enumerate(dims):
        bound = 1.0 / jnp.sqrt(fan_in)
        params[f"w{i+1}"] = jax.random.uniform(
            keys[2 * i], (fan_in, fan_out), jnp.float32, -bound, bound)
        params[f"b{i+1}"] = jax.random.uniform(
            keys[2 * i + 1], (1, fan_out), jnp.float32, -bound, bound)
    return params


def rejnet_reference(x, params):
    h = jnp.tanh(x @ params["w1"] + params["b1"])
    h = jnp.tanh(h @ params["w2"] + params["b2"])
    return h @ params["w3"] + params["b3"]


if __name__ == "__main__":
    key = jax.random.PRNGKey(0)
    k_x, k_p = jax.random.split(key)

    # Small synthetic shapes consistent with RejNet(d); B=200 with tm=128
    # exercises multi-step pipelining and the batch-padding path (pads to 256).
    B, d = 200, 32
    x = jax.random.normal(k_x, (B, d), jnp.float32)
    params = init_params(k_p, d)

    out = rejnet_forward(x, params, tm=128)
    out = jax.block_until_ready(out)

    ref = rejnet_reference(x, params)
    assert out.shape == (B, 1)
    # bf16 MXU operands -> loosened tolerance vs the f32 reference.
    assert jnp.allclose(out, ref, atol=5e-2, rtol=5e-2), (
        float(jnp.max(jnp.abs(out - ref))))

    print("KERNEL_OK")
</pallas_src>

<mosaic_0001>
module attributes {stable_mosaic.version = 11 : i64} {
  func.func @rejnet_kernel(%arg0: i32, %arg1: memref<32x64xbf16, #tpu.memory_space<vmem>>, %arg2: memref<1x64xf32, #tpu.memory_space<vmem>>, %arg3: memref<64x32xbf16, #tpu.memory_space<vmem>>, %arg4: memref<1x32xf32, #tpu.memory_space<vmem>>, %arg5: memref<1x32xf32, #tpu.memory_space<vmem>>, %arg6: memref<1x1xf32, #tpu.memory_space<vmem>>, %arg7: memref<128x32xbf16, #tpu.memory_space<vmem>>, %arg8: memref<128x1xf32, #tpu.memory_space<vmem>>) attributes {dimension_semantics = [#tpu.dimension_semantics<parallel>], iteration_bounds = array<i64: 2>, scalar_prefetch = 0 : i64, scratch_operands = 0 : i64, tpu.core_type = #tpu.core_type<tc>, window_params = [{pipeline_mode = #tpu.pipeline_mode<synchronous>, transform_indices = @transform_0, window_bounds = array<i64: 32, 64>}, {pipeline_mode = #tpu.pipeline_mode<synchronous>, transform_indices = @transform_1, window_bounds = array<i64: 1, 64>}, {pipeline_mode = #tpu.pipeline_mode<synchronous>, transform_indices = @transform_2, window_bounds = array<i64: 64, 32>}, {pipeline_mode = #tpu.pipeline_mode<synchronous>, transform_indices = @transform_3, window_bounds = array<i64: 1, 32>}, {pipeline_mode = #tpu.pipeline_mode<synchronous>, transform_indices = @transform_4, window_bounds = array<i64: 1, 32>}, {pipeline_mode = #tpu.pipeline_mode<synchronous>, transform_indices = @transform_5, window_bounds = array<i64: 1, 1>}, {transform_indices = @transform_6, window_bounds = array<i64: 128, 32>}, {transform_indices = @transform_7, window_bounds = array<i64: 128, 1>}]} {
    %c0 = arith.constant 0 : index
    %c0_0 = arith.constant 0 : index
    %0 = vector.load %arg7[%c0, %c0_0] : memref<128x32xbf16, #tpu.memory_space<vmem>>, vector<128x32xbf16>
    %c0_1 = arith.constant 0 : index
    %c0_2 = arith.constant 0 : index
    %1 = vector.load %arg1[%c0_1, %c0_2] : memref<32x64xbf16, #tpu.memory_space<vmem>>, vector<32x64xbf16>
    %cst = arith.constant dense<0.000000e+00> : vector<128x64xf32>
    %2 = tpu.matmul %0, %1, %cst {dimension_numbers = #tpu.dot_dimension_numbers<[1], [0], [0], [1], [0, 0, 1, 1], [], []>} : vector<128x32xbf16>, vector<32x64xbf16>, vector<128x64xf32> -> vector<128x64xf32>
    %c0_3 = arith.constant 0 : index
    %c0_4 = arith.constant 0 : index
    %3 = vector.load %arg2[%c0_3, %c0_4] : memref<1x64xf32, #tpu.memory_space<vmem>>, vector<1x64xf32>
    %4 = vector.broadcast %3 : vector<1x64xf32> to vector<128x64xf32>
    %5 = arith.addf %2, %4 : vector<128x64xf32>
    %6 = math.tanh %5 : vector<128x64xf32>
    %7 = arith.truncf %6 : vector<128x64xf32> to vector<128x64xbf16>
    %c0_5 = arith.constant 0 : index
    %c0_6 = arith.constant 0 : index
    %8 = vector.load %arg3[%c0_5, %c0_6] : memref<64x32xbf16, #tpu.memory_space<vmem>>, vector<64x32xbf16>
    %cst_7 = arith.constant dense<0.000000e+00> : vector<128x32xf32>
    %9 = tpu.matmul %7, %8, %cst_7 {dimension_numbers = #tpu.dot_dimension_numbers<[1], [0], [0], [1], [0, 0, 1, 1], [], []>} : vector<128x64xbf16>, vector<64x32xbf16>, vector<128x32xf32> -> vector<128x32xf32>
    %c0_8 = arith.constant 0 : index
    %c0_9 = arith.constant 0 : index
    %10 = vector.load %arg4[%c0_8, %c0_9] : memref<1x32xf32, #tpu.memory_space<vmem>>, vector<1x32xf32>
    %11 = vector.broadcast %10 : vector<1x32xf32> to vector<128x32xf32>
    %12 = arith.addf %9, %11 : vector<128x32xf32>
    %13 = math.tanh %12 : vector<128x32xf32>
    %c0_10 = arith.constant 0 : index
    %c0_11 = arith.constant 0 : index
    %14 = vector.load %arg5[%c0_10, %c0_11] : memref<1x32xf32, #tpu.memory_space<vmem>>, vector<1x32xf32>
    %15 = vector.broadcast %14 : vector<1x32xf32> to vector<128x32xf32>
    %16 = arith.mulf %13, %15 : vector<128x32xf32>
    %cst_12 = arith.constant dense<0.000000e+00> : vector<128xf32>
    %17 = vector.multi_reduction <add>, %16, %cst_12 [1] : vector<128x32xf32> to vector<128xf32>
    %18 = vector.shape_cast %17 : vector<128xf32> to vector<128x1xf32>
    %c0_13 = arith.constant 0 : index
    %c0_14 = arith.constant 0 : index
    %19 = vector.load %arg6[%c0_13, %c0_14] : memref<1x1xf32, #tpu.memory_space<vmem>>, vector<1x1xf32>
    %20 = vector.broadcast %19 : vector<1x1xf32> to vector<128x1xf32>
    %21 = arith.addf %18, %20 : vector<128x1xf32>
    %c0_15 = arith.constant 0 : index
    %c0_16 = arith.constant 0 : index
    %22 = vector.load %arg8[%c0_15, %c0_16] : memref<128x1xf32, #tpu.memory_space<vmem>>, vector<128x1xf32>
    tpu.vector_store %arg8[%c0_15, %c0_16], %21 {strides = array<i32>} : memref<128x1xf32, #tpu.memory_space<vmem>>, vector<128x1xf32>,
    return
  }
  func.func @transform_0(%arg0: i32) -> (i32, i32) {
    %c0_i32 = arith.constant 0 : i32
    %c0_i32_0 = arith.constant 0 : i32
    %c0_i32_1 = arith.constant 0 : i32
    return %c0_i32, %c0_i32_0 : i32, i32
  }
  func.func @transform_1(%arg0: i32) -> (i32, i32) {
    %c0_i32 = arith.constant 0 : i32
    %c0_i32_0 = arith.constant 0 : i32
    %c0_i32_1 = arith.constant 0 : i32
    return %c0_i32, %c0_i32_0 : i32, i32
  }
  func.func @transform_2(%arg0: i32) -> (i32, i32) {
    %c0_i32 = arith.constant 0 : i32
    %c0_i32_0 = arith.constant 0 : i32
    %c0_i32_1 = arith.constant 0 : i32
    return %c0_i32, %c0_i32_0 : i32, i32
  }
  func.func @transform_3(%arg0: i32) -> (i32, i32) {
    %c0_i32 = arith.constant 0 : i32
    %c0_i32_0 = arith.constant 0 : i32
    %c0_i32_1 = arith.constant 0 : i32
    return %c0_i32, %c0_i32_0 : i32, i32
  }
  func.func @transform_4(%arg0: i32) -> (i32, i32) {
    %c0_i32 = arith.constant 0 : i32
    %c0_i32_0 = arith.constant 0 : i32
    %c0_i32_1 = arith.constant 0 : i32
    return %c0_i32, %c0_i32_0 : i32, i32
  }
  func.func @transform_5(%arg0: i32) -> (i32, i32) {
    %c0_i32 = arith.constant 0 : i32
    %c0_i32_0 = arith.constant 0 : i32
    %c0_i32_1 = arith.constant 0 : i32
    return %c0_i32, %c0_i32_0 : i32, i32
  }
  func.func @transform_6(%arg0: i32) -> (i32, i32) {
    %c0_i32 = arith.constant 0 : i32
    %c0_i32_0 = arith.constant 0 : i32
    return %arg0, %c0_i32 : i32, i32
  }
  func.func @transform_7(%arg0: i32) -> (i32, i32) {
    %c0_i32 = arith.constant 0 : i32
    %c0_i32_0 = arith.constant 0 : i32
    return %arg0, %c0_i32 : i32, i32
  }
}

</mosaic_0001>

<llo_original>
// kernel: tpu_custom_call.1
$region0: #{tpu_custom_call.1}
  #allocation0 [shape = 'u32[]', space=smem, size = 0x4, offset = 0x4, fixed_abs, tag = 'smem constant byte address 0x4 - core index']
  #allocation1 [shape = 'u32[144,128]{1,0:T(1,128)}', space=vmem, size = 0x12000, scoped, tag = 'internal scratch']
  #allocation2 [shape = 'f32[1,1]{1,0:T(1,128)S(1)}', space=vmem, size = 0x200, scoped, tag = 'scoped memory for tpu_custom_call.1']
  %s0 = inlined_call_operand.vmem [shape: bf16[32,64], index: 0, kind: input, shape index: {}]
  %s1 = inlined_call_operand.vmem [shape: f32[1,64], index: 1, kind: input, shape index: {}]
  %s2 = inlined_call_operand.vmem [shape: bf16[64,32], index: 2, kind: input, shape index: {}]
  %s3 = inlined_call_operand.vmem [shape: f32[1,32], index: 3, kind: input, shape index: {}]
  %s4 = inlined_call_operand.vmem [shape: f32[1,32], index: 4, kind: input, shape index: {}]
  %s5 = inlined_call_operand.<no memory space> [shape: f32[1,1], index: 5, kind: input, shape index: {}]
  %s6 = inlined_call_operand.vmem [shape: bf16[256,32], index: 6, kind: input, shape index: {}]
  %s7 = inlined_call_operand.vmem [shape: f32[256,1], index: 7, kind: output, shape index: {}]
  %s8 = sld [smem:[#allocation0]]
  $region61: #{tpu_custom_call.1} parent=0
    _
  %s10 = ssub.s32 1, %s8
  %s11 = scalar_select 0, %s10, %s8
  %v12 = vstv %s5
  %13 = vst [vmem:[#allocation2] sm:$0x1] %v12
  loop: start=0, step=1, limit=4
  $region2: #{tpu_custom_call.1} parent=0 // loop_pre_header
    _
  $region3: #{tpu_custom_call.1} parent=0 // loop_header
    %s15 = sphi 0, %s19
    %p16 = scmp.ge.s32.totalorder %s15, 4
    %s23 = sphi 0, %s23
    %s25 = sphi 0, %s23
    %s26 = sphi 0, %s25
    %s40 = sphi 0, %s26
    %s44 = sphi 0, %s44
    %s46 = sphi 0, %s44
    %s47 = sphi 0, %s46
    %s61 = sphi 0, %s47
    %s65 = sphi 0, %s65
    %s67 = sphi 0, %s65
    %s68 = sphi 0, %s67
    %s82 = sphi 0, %s68
    %s86 = sphi 0, %s86
    %s88 = sphi 0, %s86
    %s89 = sphi 0, %s88
    %s103 = sphi 0, %s89
    %s107 = sphi 0, %s107
    %s109 = sphi 0, %s107
    %s110 = sphi 0, %s109
    %s124 = sphi 0, %s110
    %s128 = sphi 0, %s128
    %s130 = sphi 0, %s128
    %s131 = sphi 0, %s130
    %s145 = sphi 0, %s131
    %s151 = sphi 0, %s153
    %s154 = sphi 0, %s151
    %s155 = sphi 0, %s154
    %s171 = sphi 0, %s155
    %s177 = sphi 0, %s179
    %s180 = sphi 0, %s177
    %s181 = sphi 0, %s180
    %s197 = sphi 0, %s181
  $region4: #{tpu_custom_call.1} parent=0 // loop_header_branch
    %18 = sbr.rel (%p16) target = $region8
  $region5: #{tpu_custom_call.1} parent=0 // loop_body
    %s20 = ssub.s32 %s15, 1
    %s21 = ssub.s32 %s15, 2
    %s22 = sadd.s32 %s15, 1
    %s24 = sadd.s32 %s23, 1
    %p27 = scmp.eq.s32.totalorder %s15, 1
    %p28 = scmp.ne.s32.totalorder %s23, %s25
    %p29 = scmp.eq.s32.totalorder %s15, 0
    %p30 = por %p28, %p29
    %p31 = scmp.ne.s32.totalorder %s23, %s25
    %p32 = scmp.eq.s32.totalorder %s20, 1
    %p33 = por %p31, %p32
    %p34 = scmp.ne.s32.totalorder %s25, %s26
    %p35 = scmp.eq.s32.totalorder %s20, 0
    %p36 = por %p34, %p35
    %p37 = scmp.ne.s32.totalorder %s25, %s26
    %p38 = scmp.eq.s32.totalorder %s21, 1
    %p39 = por %p37, %p38
    %p41 = scmp.ne.s32.totalorder %s26, %s40
    %p42 = scmp.eq.s32.totalorder %s21, 0
    %p43 = por %p41, %p42
    %s45 = sadd.s32 %s44, 1
    %p48 = scmp.eq.s32.totalorder %s15, 1
    %p49 = scmp.ne.s32.totalorder %s44, %s46
    %p50 = scmp.eq.s32.totalorder %s15, 0
    %p51 = por %p49, %p50
    %p52 = scmp.ne.s32.totalorder %s44, %s46
    %p53 = scmp.eq.s32.totalorder %s20, 1
    %p54 = por %p52, %p53
    %p55 = scmp.ne.s32.totalorder %s46, %s47
    %p56 = scmp.eq.s32.totalorder %s20, 0
    %p57 = por %p55, %p56
    %p58 = scmp.ne.s32.totalorder %s46, %s47
    %p59 = scmp.eq.s32.totalorder %s21, 1
    %p60 = por %p58, %p59
    %p62 = scmp.ne.s32.totalorder %s47, %s61
    %p63 = scmp.eq.s32.totalorder %s21, 0
    %p64 = por %p62, %p63
    %s66 = sadd.s32 %s65, 1
    %p69 = scmp.eq.s32.totalorder %s15, 1
    %p70 = scmp.ne.s32.totalorder %s65, %s67
    %p71 = scmp.eq.s32.totalorder %s15, 0
    %p72 = por %p70, %p71
    %p73 = scmp.ne.s32.totalorder %s65, %s67
    %p74 = scmp.eq.s32.totalorder %s20, 1
    %p75 = por %p73, %p74
    %p76 = scmp.ne.s32.totalorder %s67, %s68
    %p77 = scmp.eq.s32.totalorder %s20, 0
    %p78 = por %p76, %p77
    %p79 = scmp.ne.s32.totalorder %s67, %s68
    %p80 = scmp.eq.s32.totalorder %s21, 1
    %p81 = por %p79, %p80
    %p83 = scmp.ne.s32.totalorder %s68, %s82
    %p84 = scmp.eq.s32.totalorder %s21, 0
    %p85 = por %p83, %p84
    %s87 = sadd.s32 %s86, 1
    %p90 = scmp.eq.s32.totalorder %s15, 1
    %p91 = scmp.ne.s32.totalorder %s86, %s88
    %p92 = scmp.eq.s32.totalorder %s15, 0
    %p93 = por %p91, %p92
    %p94 = scmp.ne.s32.totalorder %s86, %s88
    %p95 = scmp.eq.s32.totalorder %s20, 1
    %p96 = por %p94, %p95
    %p97 = scmp.ne.s32.totalorder %s88, %s89
    %p98 = scmp.eq.s32.totalorder %s20, 0
    %p99 = por %p97, %p98
    %p100 = scmp.ne.s32.totalorder %s88, %s89
    %p101 = scmp.eq.s32.totalorder %s21, 1
    %p102 = por %p100, %p101
    %p104 = scmp.ne.s32.totalorder %s89, %s103
    %p105 = scmp.eq.s32.totalorder %s21, 0
    %p106 = por %p104, %p105
    %s108 = sadd.s32 %s107, 1
    %p111 = scmp.eq.s32.totalorder %s15, 1
    %p112 = scmp.ne.s32.totalorder %s107, %s109
    %p113 = scmp.eq.s32.totalorder %s15, 0
    %p114 = por %p112, %p113
    %p115 = scmp.ne.s32.totalorder %s107, %s109
    %p116 = scmp.eq.s32.totalorder %s20, 1
    %p117 = por %p115, %p116
    %p118 = scmp.ne.s32.totalorder %s109, %s110
    %p119 = scmp.eq.s32.totalorder %s20, 0
    %p120 = por %p118, %p119
    %p121 = scmp.ne.s32.totalorder %s109, %s110
    %p122 = scmp.eq.s32.totalorder %s21, 1
    %p123 = por %p121, %p122
    %p125 = scmp.ne.s32.totalorder %s110, %s124
    %p126 = scmp.eq.s32.totalorder %s21, 0
    %p127 = por %p125, %p126
    %s129 = sadd.s32 %s128, 1
    %p132 = scmp.eq.s32.totalorder %s15, 1
    %p133 = scmp.ne.s32.totalorder %s128, %s130
    %p134 = scmp.eq.s32.totalorder %s15, 0
    %p135 = por %p133, %p134
    %p136 = scmp.ne.s32.totalorder %s128, %s130
    %p137 = scmp.eq.s32.totalorder %s20, 1
    %p138 = por %p136, %p137
    %p139 = scmp.ne.s32.totalorder %s130, %s131
    %p140 = scmp.eq.s32.totalorder %s20, 0
    %p141 = por %p139, %p140
    %p142 = scmp.ne.s32.totalorder %s130, %s131
    %p143 = scmp.eq.s32.totalorder %s21, 1
    %p144 = por %p142, %p143
    %p146 = scmp.ne.s32.totalorder %s131, %s145
    %p147 = scmp.eq.s32.totalorder %s21, 0
    %p148 = por %p146, %p147
    %s149 = ssub.s32 %s15, %s22
    %p150 = scmp.eq.s32.totalorder %s149, 0
    %s152 = sadd.s32 %s151, 1
    %s153 = scalar_select %p150, %s151, %s152
    %p156 = pneg %p150
    %p157 = scmp.eq.s32.totalorder %s15, 1
    %p158 = por %p156, %p157
    %p159 = scmp.ne.s32.totalorder %s151, %s154
    %p160 = scmp.eq.s32.totalorder %s15, 0
    %p161 = por %p159, %p160
    %p162 = scmp.ne.s32.totalorder %s151, %s154
    %p163 = scmp.eq.s32.totalorder %s20, 1
    %p164 = por %p162, %p163
    %p165 = scmp.ne.s32.totalorder %s154, %s155
    %p166 = scmp.eq.s32.totalorder %s20, 0
    %p167 = por %p165, %p166
    %p168 = scmp.ne.s32.totalorder %s154, %s155
    %p169 = scmp.eq.s32.totalorder %s21, 1
    %p170 = por %p168, %p169
    %p172 = scmp.ne.s32.totalorder %s155, %s171
    %p173 = scmp.eq.s32.totalorder %s21, 0
    %p174 = por %p172, %p173
    %s175 = ssub.s32 %s15, %s22
    %p176 = scmp.eq.s32.totalorder %s175, 0
    %s178 = sadd.s32 %s177, 1
    %s179 = scalar_select %p176, %s177, %s178
    %p182 = pneg %p176
    %p183 = scmp.eq.s32.totalorder %s15, 1
    %p184 = por %p182, %p183
    %p185 = scmp.ne.s32.totalorder %s177, %s180
    %p186 = scmp.eq.s32.totalorder %s15, 0
    %p187 = por %p185, %p186
    %p188 = scmp.ne.s32.totalorder %s177, %s180
    %p189 = scmp.eq.s32.totalorder %s20, 1
    %p190 = por %p188, %p189
    %p191 = scmp.ne.s32.totalorder %s180, %s181
    %p192 = scmp.eq.s32.totalorder %s20, 0
    %p193 = por %p191, %p192
    %p194 = scmp.ne.s32.totalorder %s180, %s181
    %p195 = scmp.eq.s32.totalorder %s21, 1
    %p196 = por %p194, %p195
    %p198 = scmp.ne.s32.totalorder %s181, %s197
    %p199 = scmp.eq.s32.totalorder %s21, 0
    %p200 = por %p198, %p199
    %p201 = scmp.le.s32.totalorder 1, %s15
    %p202 = scmp.lt.s32.totalorder %s15, 3
    %p203 = pnand %p201, %p202
    %p204 = pneg %p203
    // Predicated region
    $region9: #{tpu_custom_call.1} parent=5 // pred_check
      _
    $region10: #{tpu_custom_call.1} parent=5 // pred_check_branch
      %206 = sbr.rel (%p203) target = $region12
    $region11: #{tpu_custom_call.1} parent=5 // pred_region
      %s207 = ssub.s32 %s15, 1
      // Predicated region
      $region13: #{tpu_custom_call.1} parent=11 // pred_check
        %p208 = pneg %p36
      $region14: #{tpu_custom_call.1} parent=11 // pred_check_branch
        %210 = sbr.rel (%p208) target = $region16
      $region15: #{tpu_custom_call.1} parent=11 // pred_region
        _
      $region16: #{tpu_custom_call.1} parent=11 // pred_fallthru
        _
      // Predicated region
      $region17: #{tpu_custom_call.1} parent=11 // pred_check
        %p211 = pneg %p57
      $region18: #{tpu_custom_call.1} parent=11 // pred_check_branch
        %213 = sbr.rel (%p211) target = $region20
      $region19: #{tpu_custom_call.1} parent=11 // pred_region
        _
      $region20: #{tpu_custom_call.1} parent=11 // pred_fallthru
        _
      // Predicated region
      $region21: #{tpu_custom_call.1} parent=11 // pred_check
        %p214 = pneg %p78
      $region22: #{tpu_custom_call.1} parent=11 // pred_check_branch
        %216 = sbr.rel (%p214) target = $region24
      $region23: #{tpu_custom_call.1} parent=11 // pred_region
        _
      $region24: #{tpu_custom_call.1} parent=11 // pred_fallthru
        _
      // Predicated region
      $region25: #{tpu_custom_call.1} parent=11 // pred_check
        %p217 = pneg %p99
      $region26: #{tpu_custom_call.1} parent=11 // pred_check_branch
        %219 = sbr.rel (%p217) target = $region28
      $region27: #{tpu_custom_call.1} parent=11 // pred_region
        _
      $region28: #{tpu_custom_call.1} parent=11 // pred_fallthru
        _
      // Predicated region
      $region29: #{tpu_custom_call.1} parent=11 // pred_check
        %p220 = pneg %p120
      $region30: #{tpu_custom_call.1} parent=11 // pred_check_branch
        %222 = sbr.rel (%p220) target = $region32
      $region31: #{tpu_custom_call.1} parent=11 // pred_region
        _
      $region32: #{tpu_custom_call.1} parent=11 // pred_fallthru
        _
      // Predicated region
      $region33: #{tpu_custom_call.1} parent=11 // pred_check
        %p223 = pneg %p141
      $region34: #{tpu_custom_call.1} parent=11 // pred_check_branch
        %225 = sbr.rel (%p223) target = $region36
      $region35: #{tpu_custom_call.1} parent=11 // pred_region
        _
      $region36: #{tpu_custom_call.1} parent=11 // pred_fallthru
        _
    $region12: #{tpu_custom_call.1} parent=5 // pred_fallthru
      _
    %p226 = scmp.lt.s32.totalorder %s15, 2
    // Predicated region
    $region37: #{tpu_custom_call.1} parent=5 // pred_check
      %p227 = pneg %p226
    $region38: #{tpu_custom_call.1} parent=5 // pred_check_branch
      %229 = sbr.rel (%p227) target = $region40
    $region39: #{tpu_custom_call.1} parent=5 // pred_region
      // Predicated region
      $region41: #{tpu_custom_call.1} parent=39 // pred_check
        %p230 = pneg %p161
      $region42: #{tpu_custom_call.1} parent=39 // pred_check_branch
        %232 = sbr.rel (%p230) target = $region44
      $region43: #{tpu_custom_call.1} parent=39 // pred_region
        %s233 = smul.u32 16, %s15
        %p234 = scmp.lt.s32.totalorder %s233, 31
        %s235 = scalar_select %p234, %s233, 31
        %s236 = smul.addr %s235, 4
        %s237 = scalar_lea.vmem %s6, %s236
        %s238 = smul.u32 16, %s15
      $region44: #{tpu_custom_call.1} parent=39 // pred_fallthru
        _
    $region40: #{tpu_custom_call.1} parent=5 // pred_fallthru
      _
    %p239 = scmp.le.s32.totalorder 1, %s15
    %p240 = scmp.lt.s32.totalorder %s15, 3
    %p241 = pnand %p239, %p240
    %p242 = pneg %p241
    // Predicated region
    $region45: #{tpu_custom_call.1} parent=5 // pred_check
      _
    $region46: #{tpu_custom_call.1} parent=5 // pred_check_branch
      %244 = sbr.rel (%p241) target = $region48
    $region47: #{tpu_custom_call.1} parent=5 // pred_region
      %s245 = ssub.s32 %s15, 1
      %p246 = pneg %p36
      %p247 = pneg %p33
      %p248 = pneg %p57
      %p249 = pneg %p54
      %p250 = pneg %p78
      %p251 = pneg %p75
      %p252 = pneg %p99
      %p253 = pneg %p96
      %p254 = pneg %p120
      %p255 = pneg %p117
      %p256 = pneg %p141
      %p257 = pneg %p138
      %s258 = smul.u32 16, %s20
      %p259 = scmp.lt.s32.totalorder %s258, 31
      %s260 = scalar_select %p259, %s258, 31
      %s261 = smul.addr %s260, 4
      %s262 = scalar_lea.vmem %s6, %s261
      %p263 = pneg %p167
      %p264 = pneg %p164
      %p265 = pneg %p193
      %p266 = pneg %p190
      %s267 = smul.u32 16, %s20
      %p268 = scmp.lt.s32.totalorder %s267, 31
      %s269 = scalar_select %p268, %s267, 31
      %s270 = smul.addr %s269, 8
      %s271 = scalar_lea.vmem %s7, %s270
      %s272 = smul.u32 16, %s20
      %p273 = scmp.lt.s32.totalorder %s272, 31
      %s274 = scalar_select %p273, %s272, 31
      %s275 = smul.addr %s274, 4
      %s276 = scalar_lea.vmem %s6, %s275
      %s277 = smul.u32 16, %s20
      %s278 = smul.u32 16, %s20
      %p279 = scmp.lt.s32.totalorder %s278, 31
      %s280 = scalar_select %p279, %s278, 31
      %s281 = smul.addr %s280, 8
      %s282 = scalar_lea.vmem %s7, %s281
      %s283 = smul.u32 16, %s20
      %v285 = vld [vmem:[%s276] sm:$0xf]
      %v286 = vld [vmem:[%s276 + $0x4] sm:$0xf]
      %v287 = vld [vmem:[%s276 + $0x8] sm:$0xf]
      %v288 = vld [vmem:[%s276 + $0xc] sm:$0xf]
      %v289 = vld [vmem:[%s276 + $0x10] sm:$0xf]
      %v290 = vld [vmem:[%s276 + $0x14] sm:$0xf]
      %v291 = vld [vmem:[%s276 + $0x18] sm:$0xf]
      %v292 = vld [vmem:[%s276 + $0x1c] sm:$0xf]
      %v293 = vld [vmem:[%s276 + $0x20] sm:$0xf]
      %v294 = vld [vmem:[%s276 + $0x24] sm:$0xf]
      %v295 = vld [vmem:[%s276 + $0x28] sm:$0xf]
      %v296 = vld [vmem:[%s276 + $0x2c] sm:$0xf]
      %v297 = vld [vmem:[%s276 + $0x30] sm:$0xf]
      %v298 = vld [vmem:[%s276 + $0x34] sm:$0xf]
      %v299 = vld [vmem:[%s276 + $0x38] sm:$0xf]
      %v300 = vld [vmem:[%s276 + $0x3c] sm:$0xf]
      %v301 = vld [vmem:[%s0] sm:$0xf]
      %v302 = vld [vmem:[%s0 + $0x4] sm:$0xf]
      %v303 = vld [vmem:[%s0 + $0x8] sm:$0xf]
      %v304 = vld [vmem:[%s0 + $0xc] sm:$0xf]
      %v305 = vld [vmem:[%s1] sm:$0x1]
      %v307 = vlaneseq
      %v308 = vshrl.u32 %v307, 7
      %v309 = vsub.s32 0, %v308
      %v310 = vrot.slane %v305, %v309
      %v328 = vunpack.c.l.b16 %v285
      %v329 = vunpack.c.l.b16 %v286
      %v330 = vunpack.c.l.b16 %v287
      %v331 = vunpack.c.l.b16 %v288
      %v332 = vunpack.c.l.b16 %v289
      %v333 = vunpack.c.l.b16 %v290
      %v334 = vunpack.c.l.b16 %v291
      %v335 = vunpack.c.l.b16 %v292
      %v336 = vunpack.c.l.b16 %v293
      %v337 = vunpack.c.l.b16 %v294
      %v338 = vunpack.c.l.b16 %v295
      %v339 = vunpack.c.l.b16 %v296
      %v340 = vunpack.c.l.b16 %v297
      %v341 = vunpack.c.l.b16 %v298
      %v342 = vunpack.c.l.b16 %v299
      %v343 = vunpack.c.l.b16 %v300
      %v344 = vpack.c.b16 %v329, %v328
      %v345 = vpack.c.b16 %v331, %v330
      %v346 = vpack.c.b16 %v333, %v332
      %v347 = vpack.c.b16 %v335, %v334
      %v348 = vpack.c.b16 %v337, %v336
      %v349 = vpack.c.b16 %v339, %v338
      %v350 = vpack.c.b16 %v341, %v340
      %v351 = vpack.c.b16 %v343, %v342
      %v356 = vunpack.c.l.b16 %v301
      %v357 = vunpack.c.l.b16 %v302
      %v358 = vunpack.c.l.b16 %v303
      %v359 = vunpack.c.l.b16 %v304
      %v360 = vpack.c.b16 %v357, %v356
      %v361 = vpack.c.b16 %v359, %v358
      %vm364 = vcmask 261120
      %v366 = vsel %vm364, %v344, 0
      %v369 = vsel %vm364, %v345, 0
      %v372 = vsel %vm364, %v346, 0
      %v375 = vsel %vm364, %v347, 0
      %v378 = vsel %vm364, %v348, 0
      %v381 = vsel %vm364, %v349, 0
      %v384 = vsel %vm364, %v350, 0
      %v387 = vsel %vm364, %v351, 0
      %389 = vmatprep.subr.bf16.mxu0 0
      %390 = vmatpush1.bf16.msra.mxu0 %v360
      %391 = vmatprep.subr.bf16.mxu0 0
      %392 = vmatpush1.bf16.msra.mxu0 %v361
      %393 = vmatprep.subr.bf16.mxu0 0
      %394 = vmatpush1.bf16.msra.mxu0 0
      %395 = vmatprep.subr.bf16.mxu0 0
      %396 = vmatpush1.bf16.msra.mxu0 0
      %397 = vmatprep.subr.bf16.mxu0 0
      %398 = vmatpush1.bf16.msra.mxu0 0
      %399 = vmatprep.subr.bf16.mxu0 0
      %400 = vmatpush1.bf16.msra.mxu0 0
      %401 = vmatprep.subr.bf16.mxu0 0
      %402 = vmatpush1.bf16.msra.mxu0 0
      %403 = vmatprep.subr.bf16.mxu0 0
      %404 = vmatpush1.bf16.msra.mxu0 0
      %405 = vmatprep.subr.bf16.mxu0 0
      %406 = vmatpush1.bf16.msra.mxu0 0
      %407 = vmatprep.subr.bf16.mxu0 0
      %408 = vmatpush1.bf16.msra.mxu0 0
      %409 = vmatprep.subr.bf16.mxu0 0
      %410 = vmatpush1.bf16.msra.mxu0 0
      %411 = vmatprep.subr.bf16.mxu0 0
      %412 = vmatpush1.bf16.msra.mxu0 0
      %413 = vmatprep.subr.bf16.mxu0 0
      %414 = vmatpush1.bf16.msra.mxu0 0
      %415 = vmatprep.subr.bf16.mxu0 0
      %416 = vmatpush1.bf16.msra.mxu0 0
      %417 = vmatprep.subr.bf16.mxu0 0
      %418 = vmatpush1.bf16.msra.mxu0 0
      %419 = vmatprep.subr.bf16.mxu0 0
      %420 = vmatpush1.bf16.msra.mxu0 0
      %421 = vmatprep.mubr.bf16.mxu0 0
      %422 = vmatmul.mubr.bf16.gmra.mrb[0].mxu0 %v366
      %v423 = vpop.f32.mrb[0].mxu0
      %v424 = vadd.f32 %v310, %v423
      %v425 = vpop.f32.mrb[0].mxu0
      %v426 = vpop.f32.mrb[0].mxu0
      %v427 = vadd.f32 %v310, %v426
      %v428 = vpop.f32.mrb[0].mxu0
      %429 = vmatprep.mubr.bf16.mxu0 0
      %430 = vmatmul.mubr.bf16.gmra.mrb[0].mxu0 %v369
      %v431 = vpop.f32.mrb[0].mxu0
      %v432 = vadd.f32 %v310, %v431
      %v433 = vpop.f32.mrb[0].mxu0
      %v434 = vpop.f32.mrb[0].mxu0
      %v435 = vadd.f32 %v310, %v434
      %v436 = vpop.f32.mrb[0].mxu0
      %437 = vmatprep.mubr.bf16.mxu0 0
      %438 = vmatmul.mubr.bf16.gmra.mrb[0].mxu0 %v372
      %v439 = vpop.f32.mrb[0].mxu0
      %v440 = vadd.f32 %v310, %v439
      %v441 = vpop.f32.mrb[0].mxu0
      %v442 = vpop.f32.mrb[0].mxu0
      %v443 = vadd.f32 %v310, %v442
      %v444 = vpop.f32.mrb[0].mxu0
      %445 = vmatprep.mubr.bf16.mxu0 0
      %446 = vmatmul.mubr.bf16.gmra.mrb[0].mxu0 %v375
      %v447 = vpop.f32.mrb[0].mxu0
      %v448 = vadd.f32 %v310, %v447
      %v449 = vpop.f32.mrb[0].mxu0
      %v450 = vpop.f32.mrb[0].mxu0
      %v451 = vadd.f32 %v310, %v450
      %v452 = vpop.f32.mrb[0].mxu0
      %453 = vmatprep.mubr.bf16.mxu0 0
      %454 = vmatmul.mubr.bf16.gmra.mrb[0].mxu0 %v378
      %v455 = vpop.f32.mrb[0].mxu0
      %v456 = vadd.f32 %v310, %v455
      %v457 = vpop.f32.mrb[0].mxu0
      %v458 = vpop.f32.mrb[0].mxu0
      %v459 = vadd.f32 %v310, %v458
      %v460 = vpop.f32.mrb[0].mxu0
      %461 = vmatprep.mubr.bf16.mxu0 0
      %462 = vmatmul.mubr.bf16.gmra.mrb[0].mxu0 %v381
      %v463 = vpop.f32.mrb[0].mxu0
      %v464 = vadd.f32 %v310, %v463
      %v465 = vpop.f32.mrb[0].mxu0
      %v466 = vpop.f32.mrb[0].mxu0
      %v467 = vadd.f32 %v310, %v466
      %v468 = vpop.f32.mrb[0].mxu0
      %469 = vmatprep.mubr.bf16.mxu0 0
      %470 = vmatmul.mubr.bf16.gmra.mrb[0].mxu0 %v384
      %v471 = vpop.f32.mrb[0].mxu0
      %v472 = vadd.f32 %v310, %v471
      %v473 = vpop.f32.mrb[0].mxu0
      %v474 = vpop.f32.mrb[0].mxu0
      %v475 = vadd.f32 %v310, %v474
      %v476 = vpop.f32.mrb[0].mxu0
      %477 = vmatprep.mubr.bf16.mxu0 0
      %478 = vmatmul.mubr.bf16.gmra.mrb[0].mxu0 %v387
      %v479 = vpop.f32.mrb[0].mxu0
      %v480 = vadd.f32 %v310, %v479
      %v481 = vpop.f32.mrb[0].mxu0
      %v482 = vpop.f32.mrb[0].mxu0
      %v483 = vadd.f32 %v310, %v482
      %v484 = vpop.f32.mrb[0].mxu0
      %485 = vdwg.mxu0
      %v486 = vtanh.pop %v424
      %v487 = vtanh.pop %v427
      %v488 = vtanh.pop %v432
      %v489 = vtanh.pop %v435
      %v490 = vtanh.pop %v440
      %v491 = vtanh.pop %v443
      %v492 = vtanh.pop %v448
      %v493 = vtanh.pop %v451
      %v494 = vtanh.pop %v456
      %v495 = vtanh.pop %v459
      %v496 = vtanh.pop %v464
      %v497 = vtanh.pop %v467
      %v498 = vtanh.pop %v472
      %v499 = vtanh.pop %v475
      %v500 = vtanh.pop %v480
      %v501 = vtanh.pop %v483
      %v502 = vpack.c.bf16 %v487, %v486
      %v503 = vpack.c.bf16 %v489, %v488
      %v504 = vpack.c.bf16 %v491, %v490
      %v505 = vpack.c.bf16 %v493, %v492
      %v506 = vpack.c.bf16 %v495, %v494
      %v507 = vpack.c.bf16 %v497, %v496
      %v508 = vpack.c.bf16 %v499, %v498
      %v509 = vpack.c.bf16 %v501, %v500
      %v510 = vld [vmem:[%s2] sm:$0xf]
      %v511 = vld [vmem:[%s2 + $0x4] sm:$0xf]
      %v512 = vld [vmem:[%s2 + $0x8] sm:$0xf]
      %v513 = vld [vmem:[%s2 + $0xc] sm:$0xf]
      %v514 = vld [vmem:[%s2 + $0x10] sm:$0xf]
      %v515 = vld [vmem:[%s2 + $0x14] sm:$0xf]
      %v516 = vld [vmem:[%s2 + $0x18] sm:$0xf]
      %v517 = vld [vmem:[%s2 + $0x1c] sm:$0xf]
      %v518 = vld [vmem:[%s3] sm:$0x1]
      %v520 = vlaneseq
      %v521 = vshrl.u32 %v520, 7
      %v522 = vsub.s32 0, %v521
      %v523 = vrot.slane %v518, %v522
      %v533 = vunpack.c.l.b16 %v510
      %v534 = vunpack.c.l.b16 %v511
      %v535 = vunpack.c.l.b16 %v512
      %v536 = vunpack.c.l.b16 %v513
      %v537 = vunpack.c.l.b16 %v514
      %v538 = vunpack.c.l.b16 %v515
      %v539 = vunpack.c.l.b16 %v516
      %v540 = vunpack.c.l.b16 %v517
      %v541 = vpack.c.b16 %v534, %v533
      %v542 = vpack.c.b16 %v536, %v535
      %v543 = vpack.c.b16 %v538, %v537
      %v544 = vpack.c.b16 %v540, %v539
      %vm549 = vcmask 523264
      %v551 = vsel %vm549, %v502, 0
      %v554 = vsel %vm549, %v503, 0
      %v557 = vsel %vm549, %v504, 0
      %v560 = vsel %vm549, %v505, 0
      %v563 = vsel %vm549, %v506, 0
      %v566 = vsel %vm549, %v507, 0
      %v569 = vsel %vm549, %v508, 0
      %v572 = vsel %vm549, %v509, 0
      %574 = vmatprep.subr.bf16.mxu0 0
      %575 = vmatpush1.bf16.msra.mxu0 %v541
      %576 = vmatprep.subr.bf16.mxu0 0
      %577 = vmatpush1.bf16.msra.mxu0 %v542
      %578 = vmatprep.subr.bf16.mxu0 0
      %579 = vmatpush1.bf16.msra.mxu0 %v543
      %580 = vmatprep.subr.bf16.mxu0 0
      %581 = vmatpush1.bf16.msra.mxu0 %v544
      %582 = vmatprep.subr.bf16.mxu0 0
      %583 = vmatpush1.bf16.msra.mxu0 0
      %584 = vmatprep.subr.bf16.mxu0 0
      %585 = vmatpush1.bf16.msra.mxu0 0
      %586 = vmatprep.subr.bf16.mxu0 0
      %587 = vmatpush1.bf16.msra.mxu0 0
      %588 = vmatprep.subr.bf16.mxu0 0
      %589 = vmatpush1.bf16.msra.mxu0 0
      %590 = vmatprep.subr.bf16.mxu0 0
      %591 = vmatpush1.bf16.msra.mxu0 0
      %592 = vmatprep.subr.bf16.mxu0 0
      %593 = vmatpush1.bf16.msra.mxu0 0
      %594 = vmatprep.subr.bf16.mxu0 0
      %595 = vmatpush1.bf16.msra.mxu0 0
      %596 = vmatprep.subr.bf16.mxu0 0
      %597 = vmatpush1.bf16.msra.mxu0 0
      %598 = vmatprep.subr.bf16.mxu0 0
      %599 = vmatpush1.bf16.msra.mxu0 0
      %600 = vmatprep.subr.bf16.mxu0 0
      %601 = vmatpush1.bf16.msra.mxu0 0
      %602 = vmatprep.subr.bf16.mxu0 0
      %603 = vmatpush1.bf16.msra.mxu0 0
      %604 = vmatprep.subr.bf16.mxu0 0
      %605 = vmatpush1.bf16.msra.mxu0 0
      %606 = vmatprep.mubr.bf16.mxu0 0
      %607 = vmatmul.mubr.bf16.gmra.mrb[0].mxu0 %v551
      %v608 = vpop.f32.mrb[0].mxu0
      %v609 = vadd.f32 %v523, %v608
      %v610 = vpop.f32.mrb[0].mxu0
      %v611 = vpop.f32.mrb[0].mxu0
      %v612 = vadd.f32 %v523, %v611
      %v613 = vpop.f32.mrb[0].mxu0
      %614 = vmatprep.mubr.bf16.mxu0 0
      %615 = vmatmul.mubr.bf16.gmra.mrb[0].mxu0 %v554
      %v616 = vpop.f32.mrb[0].mxu0
      %v617 = vadd.f32 %v523, %v616
      %v618 = vpop.f32.mrb[0].mxu0
      %v619 = vpop.f32.mrb[0].mxu0
      %v620 = vadd.f32 %v523, %v619
      %v621 = vpop.f32.mrb[0].mxu0
      %622 = vmatprep.mubr.bf16.mxu0 0
      %623 = vmatmul.mubr.bf16.gmra.mrb[0].mxu0 %v557
      %v624 = vpop.f32.mrb[0].mxu0
      %v625 = vadd.f32 %v523, %v624
      %v626 = vpop.f32.mrb[0].mxu0
      %v627 = vpop.f32.mrb[0].mxu0
      %v628 = vadd.f32 %v523, %v627
      %v629 = vpop.f32.mrb[0].mxu0
      %630 = vmatprep.mubr.bf16.mxu0 0
      %631 = vmatmul.mubr.bf16.gmra.mrb[0].mxu0 %v560
      %v632 = vpop.f32.mrb[0].mxu0
      %v633 = vadd.f32 %v523, %v632
      %v634 = vpop.f32.mrb[0].mxu0
      %v635 = vpop.f32.mrb[0].mxu0
      %v636 = vadd.f32 %v523, %v635
      %v637 = vpop.f32.mrb[0].mxu0
      %638 = vmatprep.mubr.bf16.mxu0 0
      %639 = vmatmul.mubr.bf16.gmra.mrb[0].mxu0 %v563
      %v640 = vpop.f32.mrb[0].mxu0
      %v641 = vadd.f32 %v523, %v640
      %v642 = vpop.f32.mrb[0].mxu0
      %v643 = vpop.f32.mrb[0].mxu0
      %v644 = vadd.f32 %v523, %v643
      %v645 = vpop.f32.mrb[0].mxu0
      %646 = vmatprep.mubr.bf16.mxu0 0
      %647 = vmatmul.mubr.bf16.gmra.mrb[0].mxu0 %v566
      %v648 = vpop.f32.mrb[0].mxu0
      %v649 = vadd.f32 %v523, %v648
      %v650 = vpop.f32.mrb[0].mxu0
      %v651 = vpop.f32.mrb[0].mxu0
      %v652 = vadd.f32 %v523, %v651
      %v653 = vpop.f32.mrb[0].mxu0
      %654 = vmatprep.mubr.bf16.mxu0 0
      %655 = vmatmul.mubr.bf16.gmra.mrb[0].mxu0 %v569
      %v656 = vpop.f32.mrb[0].mxu0
      %v657 = vadd.f32 %v523, %v656
      %v658 = vpop.f32.mrb[0].mxu0
      %v659 = vpop.f32.mrb[0].mxu0
      %v660 = vadd.f32 %v523, %v659
      %v661 = vpop.f32.mrb[0].mxu0
      %662 = vmatprep.mubr.bf16.mxu0 0
      %663 = vmatmul.mubr.bf16.gmra.mrb[0].mxu0 %v572
      %v664 = vpop.f32.mrb[0].mxu0
      %v665 = vadd.f32 %v523, %v664
      %v666 = vpop.f32.mrb[0].mxu0
      %v667 = vpop.f32.mrb[0].mxu0
      %v668 = vadd.f32 %v523, %v667
      %v669 = vpop.f32.mrb[0].mxu0
      %670 = vdwg.mxu0
      %v671 = vtanh.pop %v609
      %v672 = vtanh.pop %v612
      %v673 = vtanh.pop %v617
      %v674 = vtanh.pop %v620
      %v675 = vtanh.pop %v625
      %v676 = vtanh.pop %v628
      %v677 = vtanh.pop %v633
      %v678 = vtanh.pop %v636
      %v679 = vtanh.pop %v641
      %v680 = vtanh.pop %v644
      %v681 = vtanh.pop %v649
      %v682 = vtanh.pop %v652
      %v683 = vtanh.pop %v657
      %v684 = vtanh.pop %v660
      %v685 = vtanh.pop %v665
      %v686 = vtanh.pop %v668
      %v687 = vld [vmem:[%s4] sm:$0x1]
      %v689 = vlaneseq
      %v690 = vshrl.u32 %v689, 7
      %v691 = vsub.s32 0, %v690
      %v692 = vrot.slane %v687, %v691
      %v694 = vmul.f32 %v671, %v692
      %v695 = vmul.f32 %v672, %v692
      %v696 = vmul.f32 %v673, %v692
      %v697 = vmul.f32 %v674, %v692
      %v698 = vmul.f32 %v675, %v692
      %v699 = vmul.f32 %v676, %v692
      %v700 = vmul.f32 %v677, %v692
      %v701 = vmul.f32 %v678, %v692
      %v702 = vmul.f32 %v679, %v692
      %v703 = vmul.f32 %v680, %v692
      %v704 = vmul.f32 %v681, %v692
      %v705 = vmul.f32 %v682, %v692
      %v706 = vmul.f32 %v683, %v692
      %v707 = vmul.f32 %v684, %v692
      %v708 = vmul.f32 %v685, %v692
      %v709 = vmul.f32 %v686, %v692
      %v710 = vsel %vm364, %v694, 0.0
      %711 = vadd.xlane.f32.xlu0 %v710
      %v712 = vpop.xlane.xlu0 %711
      %v713 = vsel %vm364, %v695, 0.0
      %714 = vadd.xlane.f32.xlu0 %v713
      %v715 = vpop.xlane.xlu0 %714
      %v716 = vsel %vm364, %v696, 0.0
      %717 = vadd.xlane.f32.xlu0 %v716
      %v718 = vpop.xlane.xlu0 %717
      %v719 = vsel %vm364, %v697, 0.0
      %720 = vadd.xlane.f32.xlu0 %v719
      %v721 = vpop.xlane.xlu0 %720
      %v722 = vsel %vm364, %v698, 0.0
      %723 = vadd.xlane.f32.xlu0 %v722
      %v724 = vpop.xlane.xlu0 %723
      %v725 = vsel %vm364, %v699, 0.0
      %726 = vadd.xlane.f32.xlu0 %v725
      %v727 = vpop.xlane.xlu0 %726
      %v728 = vsel %vm364, %v700, 0.0
      %729 = vadd.xlane.f32.xlu0 %v728
      %v730 = vpop.xlane.xlu0 %729
      %v731 = vsel %vm364, %v701, 0.0
      %732 = vadd.xlane.f32.xlu0 %v731
      %v733 = vpop.xlane.xlu0 %732
      %v734 = vsel %vm364, %v702, 0.0
      %735 = vadd.xlane.f32.xlu0 %v734
      %v736 = vpop.xlane.xlu0 %735
      %v737 = vsel %vm364, %v703, 0.0
      %738 = vadd.xlane.f32.xlu0 %v737
      %v739 = vpop.xlane.xlu0 %738
      %v740 = vsel %vm364, %v704, 0.0
      %741 = vadd.xlane.f32.xlu0 %v740
      %v742 = vpop.xlane.xlu0 %741
      %v743 = vsel %vm364, %v705, 0.0
      %744 = vadd.xlane.f32.xlu0 %v743
      %v745 = vpop.xlane.xlu0 %744
      %v746 = vsel %vm364, %v706, 0.0
      %747 = vadd.xlane.f32.xlu0 %v746
      %v748 = vpop.xlane.xlu0 %747
      %v749 = vsel %vm364, %v707, 0.0
      %750 = vadd.xlane.f32.xlu0 %v749
      %v751 = vpop.xlane.xlu0 %750
      %v752 = vsel %vm364, %v708, 0.0
      %753 = vadd.xlane.f32.xlu0 %v752
      %v754 = vpop.xlane.xlu0 %753
      %v755 = vsel %vm364, %v709, 0.0
      %756 = vadd.xlane.f32.xlu0 %v755
      %v757 = vpop.xlane.xlu0 %756
      %v758 = vld [vmem:[#allocation2] sm:$0x1]
      %v760 = vlaneseq
      %v761 = vshrl.u32 %v760, 7
      %v762 = vsub.s32 0, %v761
      %v763 = vrot.slane %v758, %v762
      %v765 = vadd.f32 %v712, %v763
      %v766 = vadd.f32 %v715, %v763
      %v767 = vadd.f32 %v718, %v763
      %v768 = vadd.f32 %v721, %v763
      %v769 = vadd.f32 %v724, %v763
      %v770 = vadd.f32 %v727, %v763
      %v771 = vadd.f32 %v730, %v763
      %v772 = vadd.f32 %v733, %v763
      %v773 = vadd.f32 %v736, %v763
      %v774 = vadd.f32 %v739, %v763
      %v775 = vadd.f32 %v742, %v763
      %v776 = vadd.f32 %v745, %v763
      %v777 = vadd.f32 %v748, %v763
      %v778 = vadd.f32 %v751, %v763
      %v779 = vadd.f32 %v754, %v763
      %v780 = vadd.f32 %v757, %v763
      %vm781 = vcmask 7168
      %782 = vst.msk [vmem:[%s282] sm:$0xff] %vm781, %v765
      %783 = vst.msk [vmem:[%s282 + $0x8] sm:$0xff] %vm781, %v766
      %784 = vst.msk [vmem:[%s282 + $0x10] sm:$0xff] %vm781, %v767
      %785 = vst.msk [vmem:[%s282 + $0x18] sm:$0xff] %vm781, %v768
      %786 = vst.msk [vmem:[%s282 + $0x20] sm:$0xff] %vm781, %v769
      %787 = vst.msk [vmem:[%s282 + $0x28] sm:$0xff] %vm781, %v770
      %788 = vst.msk [vmem:[%s282 + $0x30] sm:$0xff] %vm781, %v771
      %789 = vst.msk [vmem:[%s282 + $0x38] sm:$0xff] %vm781, %v772
      %790 = vst.msk [vmem:[%s282 + $0x40] sm:$0xff] %vm781, %v773
      %791 = vst.msk [vmem:[%s282 + $0x48] sm:$0xff] %vm781, %v774
      %792 = vst.msk [vmem:[%s282 + $0x50] sm:$0xff] %vm781, %v775
      %793 = vst.msk [vmem:[%s282 + $0x58] sm:$0xff] %vm781, %v776
      %794 = vst.msk [vmem:[%s282 + $0x60] sm:$0xff] %vm781, %v777
      %795 = vst.msk [vmem:[%s282 + $0x68] sm:$0xff] %vm781, %v778
      %796 = vst.msk [vmem:[%s282 + $0x70] sm:$0xff] %vm781, %v779
      %797 = vst.msk [vmem:[%s282 + $0x78] sm:$0xff] %vm781, %v780
      %s798 = smul.u32 16, %s20
      %p799 = scmp.lt.s32.totalorder %s798, 31
      %s800 = scalar_select %p799, %s798, 31
      %s801 = smul.addr %s800, 8
      %s802 = scalar_lea.vmem %s7, %s801
      // Predicated region
      $region49: #{tpu_custom_call.1} parent=47 // pred_check
        %p803 = pneg %p190
      $region50: #{tpu_custom_call.1} parent=47 // pred_check_branch
        %805 = sbr.rel (%p803) target = $region52
      $region51: #{tpu_custom_call.1} parent=47 // pred_region
        %s806 = smul.u32 16, %s20
      $region52: #{tpu_custom_call.1} parent=47 // pred_fallthru
        _
    $region48: #{tpu_custom_call.1} parent=5 // pred_fallthru
      _
    %p807 = scmp.le.s32.totalorder 2, %s15
    // Predicated region
    $region53: #{tpu_custom_call.1} parent=5 // pred_check
      %p808 = pneg %p807
    $region54: #{tpu_custom_call.1} parent=5 // pred_check_branch
      %810 = sbr.rel (%p808) target = $region56
    $region55: #{tpu_custom_call.1} parent=5 // pred_region
      %s811 = ssub.s32 %s15, 2
      // Predicated region
      $region57: #{tpu_custom_call.1} parent=55 // pred_check
        %p812 = pneg %p196
      $region58: #{tpu_custom_call.1} parent=55 // pred_check_branch
        %814 = sbr.rel (%p812) target = $region60
      $region59: #{tpu_custom_call.1} parent=55 // pred_region
        %s815 = smul.u32 16, %s21
        %p816 = scmp.lt.s32.totalorder %s815, 31
        %s817 = scalar_select %p816, %s815, 31
        %s818 = smul.addr %s817, 8
        %s819 = scalar_lea.vmem %s7, %s818
      $region60: #{tpu_custom_call.1} parent=55 // pred_fallthru
        _
    $region56: #{tpu_custom_call.1} parent=5 // pred_fallthru
      _
  $region6: #{tpu_custom_call.1} parent=0 // loop_footer
    %s19 = sadd.s32 1, %s15
  $region7: #{tpu_custom_call.1} parent=0 // loop_footer_branch
    %14 = sbr.rel target = $region3
  $region8: #{tpu_custom_call.1} parent=0 // loop_exit
    _

</llo_original>
